<compile_context>
chip_gen: v7x
topology: tpu7x:2x2x1
jax: 0.10.0
libtpu: 0.0.40
codegen_flags: <defaults>
</compile_context>

<pallas_src>
import jax
import jax.numpy as jnp
from jax.experimental import pallas as pl
from jax.experimental.pallas import tpu as pltpu


def se_gate_kernel(w_ref, b_ref, s_ref, x_ref, o_ref):
    # 1x1 conv on a 1x1 spatial input == per-output-channel dot product.
    # w_ref: [TC, Cin], s_ref: [1, Cin], b_ref: [TC, 1] -> gate: [TC, 1] (f32)
    gate = jnp.sum(
        w_ref[...].astype(jnp.float32) * s_ref[...].astype(jnp.float32),
        axis=1, keepdims=True,
    ) + b_ref[...].astype(jnp.float32)
    gate = jax.nn.sigmoid(gate)                        # EUP transcendental
    # Broadcast gate over the HW (lane) axis and scale the activation tile.
    o_ref[...] = (gate.astype(x_ref.dtype) * x_ref[...]).astype(o_ref.dtype)


def se_module(x66, x63, weight, bias, *, tc=48):
    """x66: [1, Cin, 1, 1], x63: [1, Cout, H, W], weight: [Cout, Cin, 1, 1], bias: [Cout].

    tc = channels per grid step. 48 -> 3 steps (low per-step overhead on 1-TC
    chips); 24 -> 6 steps (even 3/3 split across v7x's 2 TensorCores).
    """
    n, cin, _, _ = x66.shape
    _, cout, h, w = x63.shape
    assert n == 1 and x63.shape[0] == 1
    assert cout % tc == 0 and tc % 8 == 0, "channel tile must divide Cout and be a multiple of 8"

    hw = h * w
    s = x66.reshape(1, cin)            # [1, 6]
    x = x63.reshape(cout, hw)          # [144, 3136]  (channels->sublanes, HW->lanes)
    wm = weight.reshape(cout, cin)     # [144, 6]
    b = bias.reshape(cout, 1)          # [144, 1]

    out = pl.pallas_call(
        se_gate_kernel,
        out_shape=jax.ShapeDtypeStruct((cout, hw), x63.dtype),
        grid=(cout // tc,),
        in_specs=[
            pl.BlockSpec((tc, cin), lambda i: (i, 0)),   # weight tile
            pl.BlockSpec((tc, 1), lambda i: (i, 0)),     # bias tile
            pl.BlockSpec((1, cin), lambda i: (0, 0)),    # squeeze vector (replicated)
            pl.BlockSpec((tc, hw), lambda i: (i, 0)),    # activation slab tile
        ],
        out_specs=pl.BlockSpec((tc, hw), lambda i: (i, 0)),
        compiler_params=pltpu.CompilerParams(
            dimension_semantics=("parallel",),           # megacore sharding on v7x
        ),
    )(wm, b, s, x)

    return out.reshape(1, cout, h, w)


if __name__ == "__main__":
    key = jax.random.PRNGKey(0)
    k1, k2, k3, k4 = jax.random.split(key, 4)

    Cin, Cout, H, W = 6, 144, 56, 56
    x66 = jax.random.normal(k1, (1, Cin, 1, 1), jnp.float32)
    x63 = jax.random.normal(k2, (1, Cout, H, W), jnp.float32)

    # Deterministic Conv2d(6, 144, 1) params (PyTorch-style uniform init bounds).
    bound = 1.0 / (Cin ** 0.5)
    weight = jax.random.uniform(k3, (Cout, Cin, 1, 1), jnp.float32, -bound, bound)
    bias = jax.random.uniform(k4, (Cout,), jnp.float32, -bound, bound)

    out = jax.block_until_ready(se_module(x66, x63, weight, bias))

    # Pure-JAX reference check.
    gate_ref = jax.nn.sigmoid(
        jnp.einsum("oc,c->o", weight.reshape(Cout, Cin), x66.reshape(Cin)) + bias
    )
    ref = gate_ref.reshape(1, Cout, 1, 1) * x63
    assert out.shape == (1, Cout, H, W)
    assert jnp.allclose(out, ref, atol=1e-5, rtol=1e-5)

    print("KERNEL_OK")
</pallas_src>

<mosaic_0001>
module attributes {stable_mosaic.version = 11 : i64} {
  func.func @se_gate_kernel(%arg0: i32, %arg1: memref<48x6xf32, #tpu.memory_space<vmem>>, %arg2: memref<48x1xf32, #tpu.memory_space<vmem>>, %arg3: memref<1x6xf32, #tpu.memory_space<vmem>>, %arg4: memref<48x3136xf32, #tpu.memory_space<vmem>>, %arg5: memref<48x3136xf32, #tpu.memory_space<vmem>>) attributes {dimension_semantics = [#tpu.dimension_semantics<parallel>], iteration_bounds = array<i64: 3>, scalar_prefetch = 0 : i64, scratch_operands = 0 : i64, tpu.core_type = #tpu.core_type<tc>, window_params = [{transform_indices = @transform_0, window_bounds = array<i64: 48, 6>}, {transform_indices = @transform_1, window_bounds = array<i64: 48, 1>}, {pipeline_mode = #tpu.pipeline_mode<synchronous>, transform_indices = @transform_2, window_bounds = array<i64: 1, 6>}, {transform_indices = @transform_3, window_bounds = array<i64: 48, 3136>}, {transform_indices = @transform_4, window_bounds = array<i64: 48, 3136>}]} {
    %c0 = arith.constant 0 : index
    %c0_0 = arith.constant 0 : index
    %0 = vector.load %arg1[%c0, %c0_0] : memref<48x6xf32, #tpu.memory_space<vmem>>, vector<48x6xf32>
    %c0_1 = arith.constant 0 : index
    %c0_2 = arith.constant 0 : index
    %1 = vector.load %arg3[%c0_1, %c0_2] : memref<1x6xf32, #tpu.memory_space<vmem>>, vector<1x6xf32>
    %2 = vector.broadcast %1 : vector<1x6xf32> to vector<48x6xf32>
    %3 = arith.mulf %0, %2 : vector<48x6xf32>
    %cst = arith.constant dense<0.000000e+00> : vector<48xf32>
    %4 = vector.multi_reduction <add>, %3, %cst [1] : vector<48x6xf32> to vector<48xf32>
    %5 = vector.shape_cast %4 : vector<48xf32> to vector<48x1xf32>
    %c0_3 = arith.constant 0 : index
    %c0_4 = arith.constant 0 : index
    %6 = vector.load %arg2[%c0_3, %c0_4] : memref<48x1xf32, #tpu.memory_space<vmem>>, vector<48x1xf32>
    %7 = arith.addf %5, %6 : vector<48x1xf32>
    %8 = arith.negf %7 : vector<48x1xf32>
    %9 = math.exp %8 : vector<48x1xf32>
    %cst_5 = arith.constant 1.000000e+00 : f32
    %10 = vector.broadcast %cst_5 : f32 to vector<48x1xf32>
    %11 = arith.addf %10, %9 : vector<48x1xf32>
    %12 = arith.divf %10, %11 : vector<48x1xf32>
    %c0_6 = arith.constant 0 : index
    %c0_7 = arith.constant 0 : index
    %13 = vector.load %arg4[%c0_6, %c0_7] : memref<48x3136xf32, #tpu.memory_space<vmem>>, vector<48x3136xf32>
    %14 = vector.broadcast %12 : vector<48x1xf32> to vector<48x3136xf32>
    %15 = arith.mulf %14, %13 : vector<48x3136xf32>
    %c0_8 = arith.constant 0 : index
    %c0_9 = arith.constant 0 : index
    %16 = vector.load %arg5[%c0_8, %c0_9] : memref<48x3136xf32, #tpu.memory_space<vmem>>, vector<48x3136xf32>
    tpu.vector_store %arg5[%c0_8, %c0_9], %15 {strides = array<i32>} : memref<48x3136xf32, #tpu.memory_space<vmem>>, vector<48x3136xf32>,
    return
  }
  func.func @transform_0(%arg0: i32) -> (i32, i32) {
    %c0_i32 = arith.constant 0 : i32
    %c0_i32_0 = arith.constant 0 : i32
    return %arg0, %c0_i32 : i32, i32
  }
  func.func @transform_1(%arg0: i32) -> (i32, i32) {
    %c0_i32 = arith.constant 0 : i32
    %c0_i32_0 = arith.constant 0 : i32
    return %arg0, %c0_i32 : i32, i32
  }
  func.func @transform_2(%arg0: i32) -> (i32, i32) {
    %c0_i32 = arith.constant 0 : i32
    %c0_i32_0 = arith.constant 0 : i32
    %c0_i32_1 = arith.constant 0 : i32
    return %c0_i32, %c0_i32_0 : i32, i32
  }
  func.func @transform_3(%arg0: i32) -> (i32, i32) {
    %c0_i32 = arith.constant 0 : i32
    %c0_i32_0 = arith.constant 0 : i32
    return %arg0, %c0_i32 : i32, i32
  }
  func.func @transform_4(%arg0: i32) -> (i32, i32) {
    %c0_i32 = arith.constant 0 : i32
    %c0_i32_0 = arith.constant 0 : i32
    return %arg0, %c0_i32 : i32, i32
  }
}

</mosaic_0001>

<llo_original>
// kernel: tpu_custom_call.1
$region0: #{tpu_custom_call.1}
  #allocation0 [shape = 'u32[]', space=smem, size = 0x4, offset = 0x4, fixed_abs, tag = 'smem constant byte address 0x4 - core index']
  #allocation1 [shape = 'u32[144,128]{1,0:T(1,128)}', space=vmem, size = 0x12000, scoped, tag = 'internal scratch']
  %s0 = inlined_call_operand.vmem [shape: f32[144,6], index: 0, kind: input, shape index: {}]
  %s1 = inlined_call_operand.vmem [shape: f32[144,1], index: 1, kind: input, shape index: {}]
  %s2 = inlined_call_operand.hbm [shape: f32[1,6], index: 2, kind: input, shape index: {}]
  %s3 = inlined_call_operand.hbm [shape: f32[144,3136], index: 3, kind: input, shape index: {}]
  %s4 = inlined_call_operand.hbm [shape: f32[144,3136], index: 4, kind: output, shape index: {}]
  %s5 = sld [smem:[#allocation0]]
  $region57: #{tpu_custom_call.1} parent=0
    _
  %s7 = ssub.s32 1, %s5
  %s8 = scalar_select 0, %s7, %s5
  $region1: #{tpu_custom_call.1} parent=0
    #allocation2 [shape = 'u8[512]{0}', space=vmem, size = 0x400, scoped, tag = 'input window, operand 2, single buffered']
    #allocation3 [shape = 's32[2]{0}', space=sflag, size = 0x8, scoped, tag = 'scoped memory for tpu_custom_call.1']
    #allocation4 [shape = 's32[2]{0}', space=sflag, size = 0x8, scoped, tag = 'scoped memory for tpu_custom_call.1']
    #allocation5 [shape = 'u8[1228800]{0}', space=vmem, size = 0x12c000, scoped, tag = 'input window, operand 3']
    #allocation6 [shape = 's32[2]{0}', space=sflag, size = 0x8, scoped, tag = 'scoped memory for tpu_custom_call.1']
    #allocation7 [shape = 'u8[1228800]{0}', space=vmem, size = 0x12c000, scoped, tag = 'output window, operand 0']
    %9 = vsyncpa [#allocation3], 0
    %10 = vsyncpa [#allocation6], 0
    %s11 = scalar_lea.sflag [#allocation6], 1
    %12 = vsyncpa %s11, 0
    %13 = vsyncpa [#allocation4], 0
    %s14 = scalar_lea.sflag [#allocation4], 1
    %15 = vsyncpa %s14, 0
    loop: start=0, step=1, limit=5
    $region2: #{tpu_custom_call.1} parent=1 // loop_pre_header
      _
    $region3: #{tpu_custom_call.1} parent=1 // loop_header
      %s17 = sphi 0, %s21
      %p18 = scmp.ge.s32.totalorder %s17, 5
      %s27 = sphi 0, %s29
      %s30 = sphi 0, %s27
      %s31 = sphi 0, %s30
      %s47 = sphi 0, %s31
      %s53 = sphi 0, %s55
      %s56 = sphi 0, %s53
      %s57 = sphi 0, %s56
      %s73 = sphi 0, %s57
      %s77 = sphi 0, %s77
      %s79 = sphi 0, %s77
      %s80 = sphi 0, %s79
      %s94 = sphi 0, %s80
      %s100 = sphi 0, %s102
      %s103 = sphi 0, %s100
      %s104 = sphi 0, %s103
      %s120 = sphi 0, %s104
      %s126 = sphi 0, %s128
      %s129 = sphi 0, %s126
      %s130 = sphi 0, %s129
      %s146 = sphi 0, %s130
    $region4: #{tpu_custom_call.1} parent=1 // loop_header_branch
      %20 = sbr.rel (%p18) target = $region8
    $region5: #{tpu_custom_call.1} parent=1 // loop_body
      %s22 = ssub.s32 %s17, 1
      %s23 = ssub.s32 %s17, 2
      %s24 = sadd.s32 %s17, 1
      %s25 = ssub.s32 %s17, %s24
      %p26 = scmp.eq.s32.totalorder %s25, 0
      %s28 = sadd.s32 %s27, 1
      %s29 = scalar_select %p26, %s27, %s28
      %p32 = pneg %p26
      %p33 = scmp.eq.s32.totalorder %s17, 2
      %p34 = por %p32, %p33
      %p35 = scmp.ne.s32.totalorder %s27, %s30
      %p36 = scmp.eq.s32.totalorder %s17, 0
      %p37 = por %p35, %p36
      %p38 = scmp.ne.s32.totalorder %s27, %s30
      %p39 = scmp.eq.s32.totalorder %s22, 2
      %p40 = por %p38, %p39
      %p41 = scmp.ne.s32.totalorder %s30, %s31
      %p42 = scmp.eq.s32.totalorder %s22, 0
      %p43 = por %p41, %p42
      %p44 = scmp.ne.s32.totalorder %s30, %s31
      %p45 = scmp.eq.s32.totalorder %s23, 2
      %p46 = por %p44, %p45
      %p48 = scmp.ne.s32.totalorder %s31, %s47
      %p49 = scmp.eq.s32.totalorder %s23, 0
      %p50 = por %p48, %p49
      %s51 = ssub.s32 %s17, %s24
      %p52 = scmp.eq.s32.totalorder %s51, 0
      %s54 = sadd.s32 %s53, 1
      %s55 = scalar_select %p52, %s53, %s54
      %p58 = pneg %p52
      %p59 = scmp.eq.s32.totalorder %s17, 2
      %p60 = por %p58, %p59
      %p61 = scmp.ne.s32.totalorder %s53, %s56
      %p62 = scmp.eq.s32.totalorder %s17, 0
      %p63 = por %p61, %p62
      %p64 = scmp.ne.s32.totalorder %s53, %s56
      %p65 = scmp.eq.s32.totalorder %s22, 2
      %p66 = por %p64, %p65
      %p67 = scmp.ne.s32.totalorder %s56, %s57
      %p68 = scmp.eq.s32.totalorder %s22, 0
      %p69 = por %p67, %p68
      %p70 = scmp.ne.s32.totalorder %s56, %s57
      %p71 = scmp.eq.s32.totalorder %s23, 2
      %p72 = por %p70, %p71
      %p74 = scmp.ne.s32.totalorder %s57, %s73
      %p75 = scmp.eq.s32.totalorder %s23, 0
      %p76 = por %p74, %p75
      %s78 = sadd.s32 %s77, 1
      %p81 = scmp.eq.s32.totalorder %s17, 2
      %p82 = scmp.ne.s32.totalorder %s77, %s79
      %p83 = scmp.eq.s32.totalorder %s17, 0
      %p84 = por %p82, %p83
      %p85 = scmp.ne.s32.totalorder %s77, %s79
      %p86 = scmp.eq.s32.totalorder %s22, 2
      %p87 = por %p85, %p86
      %p88 = scmp.ne.s32.totalorder %s79, %s80
      %p89 = scmp.eq.s32.totalorder %s22, 0
      %p90 = por %p88, %p89
      %p91 = scmp.ne.s32.totalorder %s79, %s80
      %p92 = scmp.eq.s32.totalorder %s23, 2
      %p93 = por %p91, %p92
      %p95 = scmp.ne.s32.totalorder %s80, %s94
      %p96 = scmp.eq.s32.totalorder %s23, 0
      %p97 = por %p95, %p96
      %s98 = ssub.s32 %s17, %s24
      %p99 = scmp.eq.s32.totalorder %s98, 0
      %s101 = sadd.s32 %s100, 1
      %s102 = scalar_select %p99, %s100, %s101
      %p105 = pneg %p99
      %p106 = scmp.eq.s32.totalorder %s17, 2
      %p107 = por %p105, %p106
      %p108 = scmp.ne.s32.totalorder %s100, %s103
      %p109 = scmp.eq.s32.totalorder %s17, 0
      %p110 = por %p108, %p109
      %p111 = scmp.ne.s32.totalorder %s100, %s103
      %p112 = scmp.eq.s32.totalorder %s22, 2
      %p113 = por %p111, %p112
      %p114 = scmp.ne.s32.totalorder %s103, %s104
      %p115 = scmp.eq.s32.totalorder %s22, 0
      %p116 = por %p114, %p115
      %p117 = scmp.ne.s32.totalorder %s103, %s104
      %p118 = scmp.eq.s32.totalorder %s23, 2
      %p119 = por %p117, %p118
      %p121 = scmp.ne.s32.totalorder %s104, %s120
      %p122 = scmp.eq.s32.totalorder %s23, 0
      %p123 = por %p121, %p122
      %s124 = ssub.s32 %s17, %s24
      %p125 = scmp.eq.s32.totalorder %s124, 0
      %s127 = sadd.s32 %s126, 1
      %s128 = scalar_select %p125, %s126, %s127
      %p131 = pneg %p125
      %p132 = scmp.eq.s32.totalorder %s17, 2
      %p133 = por %p131, %p132
      %p134 = scmp.ne.s32.totalorder %s126, %s129
      %p135 = scmp.eq.s32.totalorder %s17, 0
      %p136 = por %p134, %p135
      %p137 = scmp.ne.s32.totalorder %s126, %s129
      %p138 = scmp.eq.s32.totalorder %s22, 2
      %p139 = por %p137, %p138
      %p140 = scmp.ne.s32.totalorder %s129, %s130
      %p141 = scmp.eq.s32.totalorder %s22, 0
      %p142 = por %p140, %p141
      %p143 = scmp.ne.s32.totalorder %s129, %s130
      %p144 = scmp.eq.s32.totalorder %s23, 2
      %p145 = por %p143, %p144
      %p147 = scmp.ne.s32.totalorder %s130, %s146
      %p148 = scmp.eq.s32.totalorder %s23, 0
      %p149 = por %p147, %p148
      %p150 = scmp.le.s32.totalorder 1, %s17
      %p151 = scmp.lt.s32.totalorder %s17, 4
      %p152 = pnand %p150, %p151
      %p153 = pneg %p152
      // Predicated region
      $region9: #{tpu_custom_call.1} parent=5 // pred_check
        _
      $region10: #{tpu_custom_call.1} parent=5 // pred_check_branch
        %155 = sbr.rel (%p152) target = $region12
      $region11: #{tpu_custom_call.1} parent=5 // pred_region
        %s156 = ssub.s32 %s17, 1
        // Predicated region
        $region13: #{tpu_custom_call.1} parent=11 // pred_check
          %p157 = pneg %p90
        $region14: #{tpu_custom_call.1} parent=11 // pred_check_branch
          %159 = sbr.rel (%p157) target = $region16
        $region15: #{tpu_custom_call.1} parent=11 // pred_region
          %s161 = ssub.s32 16, 16
          %162 = vsyncadd [#allocation3], %s161
          %s164 = sshll.u32 [#allocation2], 4
          %s165 = int_to_ptr.vmem [resolvable:$true] %s164
          %167 = dma.hbm_to_vmem [thread:$0]  %s2, 16, %s165, [#allocation3]
        $region16: #{tpu_custom_call.1} parent=11 // pred_fallthru
          _
      $region12: #{tpu_custom_call.1} parent=5 // pred_fallthru
        _
      %p168 = scmp.lt.s32.totalorder %s17, 3
      // Predicated region
      $region17: #{tpu_custom_call.1} parent=5 // pred_check
        %p169 = pneg %p168
      $region18: #{tpu_custom_call.1} parent=5 // pred_check_branch
        %171 = sbr.rel (%p169) target = $region20
      $region19: #{tpu_custom_call.1} parent=5 // pred_region
        // Predicated region
        $region21: #{tpu_custom_call.1} parent=19 // pred_check
          %p172 = pneg %p37
        $region22: #{tpu_custom_call.1} parent=19 // pred_check_branch
          %174 = sbr.rel (%p172) target = $region24
        $region23: #{tpu_custom_call.1} parent=19 // pred_region
          %s175 = smul.u32 6, %s17
          %p176 = scmp.lt.s32.totalorder %s175, 17
          %s177 = scalar_select %p176, %s175, 17
          %s178 = smul.addr %s177, 8
          %s179 = scalar_lea.vmem %s0, %s178
          %s180 = smul.u32 6, %s17
        $region24: #{tpu_custom_call.1} parent=19 // pred_fallthru
          _
        // Predicated region
        $region25: #{tpu_custom_call.1} parent=19 // pred_check
          %p181 = pneg %p63
        $region26: #{tpu_custom_call.1} parent=19 // pred_check_branch
          %183 = sbr.rel (%p181) target = $region28
        $region27: #{tpu_custom_call.1} parent=19 // pred_region
          %s184 = smul.u32 6, %s17
          %p185 = scmp.lt.s32.totalorder %s184, 17
          %s186 = scalar_select %p185, %s184, 17
          %s187 = smul.addr %s186, 8
          %s188 = scalar_lea.vmem %s1, %s187
          %s189 = smul.u32 6, %s17
        $region28: #{tpu_custom_call.1} parent=19 // pred_fallthru
          _
        // Predicated region
        $region29: #{tpu_custom_call.1} parent=19 // pred_check
          %p190 = pneg %p110
        $region30: #{tpu_custom_call.1} parent=19 // pred_check_branch
          %192 = sbr.rel (%p190) target = $region32
        $region31: #{tpu_custom_call.1} parent=19 // pred_region
          %s193 = sand.u32 %s100, 1
          %s194 = scalar_lea.sflag [#allocation6], %s193
          %s195 = sand.u32 %s100, 1
          %s196 = smul.addr %s195, 1200
          %s197 = scalar_lea.vmem [#allocation5], %s196
          %s198 = smul.u32 6, %s17
          %s200 = ssub.s32 19200, 19200
          %201 = vsyncadd %s194, %s200
          %s202 = smul.addr %s198, 25
          %s203 = smul.addr %s202, 128
          %s204 = scalar_lea.hbm %s3, %s203
          %s205 = sshll.u32 %s197, 4
          %s206 = int_to_ptr.vmem [resolvable:$true] %s205
          %211 = dma.hbm_to_vmem [thread:$0]  %s204, 19200, %s206, %s194, 3200, 3200, 200
        $region32: #{tpu_custom_call.1} parent=19 // pred_fallthru
          _
      $region20: #{tpu_custom_call.1} parent=5 // pred_fallthru
        _
      %p212 = scmp.le.s32.totalorder 1, %s17
      %p213 = scmp.lt.s32.totalorder %s17, 4
      %p214 = pnand %p212, %p213
      %p215 = pneg %p214
      // Predicated region
      $region33: #{tpu_custom_call.1} parent=5 // pred_check
        _
      $region34: #{tpu_custom_call.1} parent=5 // pred_check_branch
        %217 = sbr.rel (%p214) target = $region36
      $region35: #{tpu_custom_call.1} parent=5 // pred_region
        %s218 = ssub.s32 %s17, 1
        // Predicated region
        $region37: #{tpu_custom_call.1} parent=35 // pred_check
          %p219 = pneg %p90
        $region38: #{tpu_custom_call.1} parent=35 // pred_check_branch
          %221 = sbr.rel (%p219) target = $region40
        $region39: #{tpu_custom_call.1} parent=35 // pred_region
          %222 = dma.done [#allocation3], 16
        $region40: #{tpu_custom_call.1} parent=35 // pred_fallthru
          _
        %s223 = sand.u32 %s103, 1
        %s224 = scalar_lea.sflag [#allocation6], %s223
        %s225 = sand.u32 %s103, 1
        %s226 = smul.addr %s225, 1200
        %s227 = scalar_lea.vmem [#allocation5], %s226
        // Predicated region
        $region41: #{tpu_custom_call.1} parent=35 // pred_check
          %p228 = pneg %p116
        $region42: #{tpu_custom_call.1} parent=35 // pred_check_branch
          %230 = sbr.rel (%p228) target = $region44
        $region43: #{tpu_custom_call.1} parent=35 // pred_region
          %231 = dma.done %s224, 19200
        $region44: #{tpu_custom_call.1} parent=35 // pred_fallthru
          _
        %s232 = smul.u32 6, %s22
        %p233 = scmp.lt.s32.totalorder %s232, 17
        %s234 = scalar_select %p233, %s232, 17
        %s235 = smul.addr %s234, 8
        %s236 = scalar_lea.vmem %s0, %s235
        %p237 = pneg %p43
        %p238 = pneg %p40
        %s239 = smul.u32 6, %s22
        %p240 = scmp.lt.s32.totalorder %s239, 17
        %s241 = scalar_select %p240, %s239, 17
        %s242 = smul.addr %s241, 8
        %s243 = scalar_lea.vmem %s1, %s242
        %p244 = pneg %p69
        %p245 = pneg %p66
        %p246 = pneg %p90
        %p247 = pneg %p87
        %s248 = sand.u32 %s103, 1
        %s249 = scalar_lea.sflag [#allocation6], %s248
        %s250 = sand.u32 %s103, 1
        %s251 = smul.addr %s250, 1200
        %s252 = scalar_lea.vmem [#allocation5], %s251
        %p253 = pneg %p116
        %p254 = pneg %p113
        %p255 = pneg %p142
        %p256 = pneg %p139
        %s257 = sand.u32 %s129, 1
        %s258 = scalar_lea.sflag [#allocation4], %s257
        %s259 = sand.u32 %s129, 1
        %s260 = smul.addr %s259, 1200
        %s261 = scalar_lea.vmem [#allocation7], %s260
        %s262 = smul.u32 6, %s22
        %p263 = scmp.lt.s32.totalorder %s262, 17
        %s264 = scalar_select %p263, %s262, 17
        %s265 = smul.addr %s264, 8
        %s266 = scalar_lea.vmem %s0, %s265
        %s267 = smul.u32 6, %s22
        %s268 = smul.u32 6, %s22
        %p269 = scmp.lt.s32.totalorder %s268, 17
        %s270 = scalar_select %p269, %s268, 17
        %s271 = smul.addr %s270, 8
        %s272 = scalar_lea.vmem %s1, %s271
        %s273 = smul.u32 6, %s22
        %s274 = smul.u32 6, %s22
        %s275 = smul.u32 6, %s22
        %v276 = vld [vmem:[%s266] sm:$0xff]
        %v277 = vld [vmem:[%s266 + $0x8] sm:$0xff]
        %v278 = vld [vmem:[%s266 + $0x10] sm:$0xff]
        %v279 = vld [vmem:[%s266 + $0x18] sm:$0xff]
        %v280 = vld [vmem:[%s266 + $0x20] sm:$0xff]
        %v281 = vld [vmem:[%s266 + $0x28] sm:$0xff]
        %v282 = vld [vmem:[#allocation2] sm:$0x1]
        %v284 = vlaneseq
        %v285 = vshrl.u32 %v284, 7
        %v286 = vsub.s32 0, %v285
        %v287 = vrot.slane %v282, %v286
        %v289 = vmul.f32 %v276, %v287
        %v290 = vmul.f32 %v277, %v287
        %v291 = vmul.f32 %v278, %v287
        %v292 = vmul.f32 %v279, %v287
        %v293 = vmul.f32 %v280, %v287
        %v294 = vmul.f32 %v281, %v287
        %vm295 = vcmask 48128
        %v296 = vsel %vm295, %v289, 0.0
        %297 = vadd.xlane.f32.xlu0 %v296
        %v298 = vpop.xlane.xlu0 %297
        %v299 = vsel %vm295, %v290, 0.0
        %300 = vadd.xlane.f32.xlu0 %v299
        %v301 = vpop.xlane.xlu0 %300
        %v302 = vsel %vm295, %v291, 0.0
        %303 = vadd.xlane.f32.xlu0 %v302
        %v304 = vpop.xlane.xlu0 %303
        %v305 = vsel %vm295, %v292, 0.0
        %306 = vadd.xlane.f32.xlu0 %v305
        %v307 = vpop.xlane.xlu0 %306
        %v308 = vsel %vm295, %v293, 0.0
        %309 = vadd.xlane.f32.xlu0 %v308
        %v310 = vpop.xlane.xlu0 %309
        %v311 = vsel %vm295, %v294, 0.0
        %312 = vadd.xlane.f32.xlu0 %v311
        %v313 = vpop.xlane.xlu0 %312
        %v314 = vld [vmem:[%s272] sm:$0xff]
        %v315 = vld [vmem:[%s272 + $0x8] sm:$0xff]
        %v316 = vld [vmem:[%s272 + $0x10] sm:$0xff]
        %v317 = vld [vmem:[%s272 + $0x18] sm:$0xff]
        %v318 = vld [vmem:[%s272 + $0x20] sm:$0xff]
        %v319 = vld [vmem:[%s272 + $0x28] sm:$0xff]
        %v320 = vadd.f32 %v298, %v314
        %v321 = vadd.f32 %v301, %v315
        %v322 = vadd.f32 %v304, %v316
        %v323 = vadd.f32 %v307, %v317
        %v324 = vadd.f32 %v310, %v318
        %v325 = vadd.f32 %v313, %v319
        %v326 = vxor.u32 %v320, 2147483648
        %v327 = vxor.u32 %v321, 2147483648
        %v328 = vxor.u32 %v322, 2147483648
        %v329 = vxor.u32 %v323, 2147483648
        %v330 = vxor.u32 %v324, 2147483648
        %v331 = vxor.u32 %v325, 2147483648
        %v332 = vmul.f32 %v326, 1.442695
        %v333 = vpow.pop %v332
        %v334 = vmul.f32 %v327, 1.442695
        %v335 = vpow.pop %v334
        %v336 = vmul.f32 %v328, 1.442695
        %v337 = vpow.pop %v336
        %v338 = vmul.f32 %v329, 1.442695
        %v339 = vpow.pop %v338
        %v340 = vmul.f32 %v330, 1.442695
        %v341 = vpow.pop %v340
        %v342 = vmul.f32 %v331, 1.442695
        %v343 = vpow.pop %v342
        %v344 = vadd.f32 %v333, 1.0
        %v345 = vadd.f32 %v335, 1.0
        %v346 = vadd.f32 %v337, 1.0
        %v347 = vadd.f32 %v339, 1.0
        %v348 = vadd.f32 %v341, 1.0
        %v349 = vadd.f32 %v343, 1.0
        %v350 = vrcp.pop %v344
        %v351 = vmul.f32 1.0, %v350
        %v352 = vrcp.pop %v345
        %v353 = vmul.f32 1.0, %v352
        %v354 = vrcp.pop %v346
        %v355 = vmul.f32 1.0, %v354
        %v356 = vrcp.pop %v347
        %v357 = vmul.f32 1.0, %v356
        %v358 = vrcp.pop %v348
        %v359 = vmul.f32 1.0, %v358
        %v360 = vrcp.pop %v349
        %v361 = vmul.f32 1.0, %v360
        %v362 = vld [vmem:[%s227] sm:$0xff]
        %v363 = vld [vmem:[%s227 + $0x8] sm:$0xff]
        %v364 = vld [vmem:[%s227 + $0x10] sm:$0xff]
        %v365 = vld [vmem:[%s227 + $0x18] sm:$0xff]
        %v366 = vld [vmem:[%s227 + $0x20] sm:$0xff]
        %v367 = vld [vmem:[%s227 + $0x28] sm:$0xff]
        %v368 = vld [vmem:[%s227 + $0x30] sm:$0xff]
        %v369 = vld [vmem:[%s227 + $0x38] sm:$0xff]
        %v370 = vld [vmem:[%s227 + $0x40] sm:$0xff]
        %v371 = vld [vmem:[%s227 + $0x48] sm:$0xff]
        %v372 = vld [vmem:[%s227 + $0x50] sm:$0xff]
        %v373 = vld [vmem:[%s227 + $0x58] sm:$0xff]
        %v374 = vld [vmem:[%s227 + $0x60] sm:$0xff]
        %v375 = vld [vmem:[%s227 + $0x68] sm:$0xff]
        %v376 = vld [vmem:[%s227 + $0x70] sm:$0xff]
        %v377 = vld [vmem:[%s227 + $0x78] sm:$0xff]
        %v378 = vld [vmem:[%s227 + $0x80] sm:$0xff]
        %v379 = vld [vmem:[%s227 + $0x88] sm:$0xff]
        %v380 = vld [vmem:[%s227 + $0x90] sm:$0xff]
        %v381 = vld [vmem:[%s227 + $0x98] sm:$0xff]
        %v382 = vld [vmem:[%s227 + $0xa0] sm:$0xff]
        %v383 = vld [vmem:[%s227 + $0xa8] sm:$0xff]
        %v384 = vld [vmem:[%s227 + $0xb0] sm:$0xff]
        %v385 = vld [vmem:[%s227 + $0xb8] sm:$0xff]
        %v386 = vld [vmem:[%s227 + $0xc0] sm:$0xff]
        %v387 = vld [vmem:[%s227 + $0xc8] sm:$0xff]
        %v388 = vld [vmem:[%s227 + $0xd0] sm:$0xff]
        %v389 = vld [vmem:[%s227 + $0xd8] sm:$0xff]
        %v390 = vld [vmem:[%s227 + $0xe0] sm:$0xff]
        %v391 = vld [vmem:[%s227 + $0xe8] sm:$0xff]
        %v392 = vld [vmem:[%s227 + $0xf0] sm:$0xff]
        %v393 = vld [vmem:[%s227 + $0xf8] sm:$0xff]
        %v394 = vld [vmem:[%s227 + $0x100] sm:$0xff]
        %v395 = vld [vmem:[%s227 + $0x108] sm:$0xff]
        %v396 = vld [vmem:[%s227 + $0x110] sm:$0xff]
        %v397 = vld [vmem:[%s227 + $0x118] sm:$0xff]
        %v398 = vld [vmem:[%s227 + $0x120] sm:$0xff]
        %v399 = vld [vmem:[%s227 + $0x128] sm:$0xff]
        %v400 = vld [vmem:[%s227 + $0x130] sm:$0xff]
        %v401 = vld [vmem:[%s227 + $0x138] sm:$0xff]
        %v402 = vld [vmem:[%s227 + $0x140] sm:$0xff]
        %v403 = vld [vmem:[%s227 + $0x148] sm:$0xff]
        %v404 = vld [vmem:[%s227 + $0x150] sm:$0xff]
        %v405 = vld [vmem:[%s227 + $0x158] sm:$0xff]
        %v406 = vld [vmem:[%s227 + $0x160] sm:$0xff]
        %v407 = vld [vmem:[%s227 + $0x168] sm:$0xff]
        %v408 = vld [vmem:[%s227 + $0x170] sm:$0xff]
        %v409 = vld [vmem:[%s227 + $0x178] sm:$0xff]
        %v410 = vld [vmem:[%s227 + $0x180] sm:$0xff]
        %v411 = vld [vmem:[%s227 + $0x188] sm:$0xff]
        %v412 = vld [vmem:[%s227 + $0x190] sm:$0xff]
        %v413 = vld [vmem:[%s227 + $0x198] sm:$0xff]
        %v414 = vld [vmem:[%s227 + $0x1a0] sm:$0xff]
        %v415 = vld [vmem:[%s227 + $0x1a8] sm:$0xff]
        %v416 = vld [vmem:[%s227 + $0x1b0] sm:$0xff]
        %v417 = vld [vmem:[%s227 + $0x1b8] sm:$0xff]
        %v418 = vld [vmem:[%s227 + $0x1c0] sm:$0xff]
        %v419 = vld [vmem:[%s227 + $0x1c8] sm:$0xff]
        %v420 = vld [vmem:[%s227 + $0x1d0] sm:$0xff]
        %v421 = vld [vmem:[%s227 + $0x1d8] sm:$0xff]
        %v422 = vld [vmem:[%s227 + $0x1e0] sm:$0xff]
        %v423 = vld [vmem:[%s227 + $0x1e8] sm:$0xff]
        %v424 = vld [vmem:[%s227 + $0x1f0] sm:$0xff]
        %v425 = vld [vmem:[%s227 + $0x1f8] sm:$0xff]
        %v426 = vld [vmem:[%s227 + $0x200] sm:$0xff]
        %v427 = vld [vmem:[%s227 + $0x208] sm:$0xff]
        %v428 = vld [vmem:[%s227 + $0x210] sm:$0xff]
        %v429 = vld [vmem:[%s227 + $0x218] sm:$0xff]
        %v430 = vld [vmem:[%s227 + $0x220] sm:$0xff]
        %v431 = vld [vmem:[%s227 + $0x228] sm:$0xff]
        %v432 = vld [vmem:[%s227 + $0x230] sm:$0xff]
        %v433 = vld [vmem:[%s227 + $0x238] sm:$0xff]
        %v434 = vld [vmem:[%s227 + $0x240] sm:$0xff]
        %v435 = vld [vmem:[%s227 + $0x248] sm:$0xff]
        %v436 = vld [vmem:[%s227 + $0x250] sm:$0xff]
        %v437 = vld [vmem:[%s227 + $0x258] sm:$0xff]
        %v438 = vld [vmem:[%s227 + $0x260] sm:$0xff]
        %v439 = vld [vmem:[%s227 + $0x268] sm:$0xff]
        %v440 = vld [vmem:[%s227 + $0x270] sm:$0xff]
        %v441 = vld [vmem:[%s227 + $0x278] sm:$0xff]
        %v442 = vld [vmem:[%s227 + $0x280] sm:$0xff]
        %v443 = vld [vmem:[%s227 + $0x288] sm:$0xff]
        %v444 = vld [vmem:[%s227 + $0x290] sm:$0xff]
        %v445 = vld [vmem:[%s227 + $0x298] sm:$0xff]
        %v446 = vld [vmem:[%s227 + $0x2a0] sm:$0xff]
        %v447 = vld [vmem:[%s227 + $0x2a8] sm:$0xff]
        %v448 = vld [vmem:[%s227 + $0x2b0] sm:$0xff]
        %v449 = vld [vmem:[%s227 + $0x2b8] sm:$0xff]
        %v450 = vld [vmem:[%s227 + $0x2c0] sm:$0xff]
        %v451 = vld [vmem:[%s227 + $0x2c8] sm:$0xff]
        %v452 = vld [vmem:[%s227 + $0x2d0] sm:$0xff]
        %v453 = vld [vmem:[%s227 + $0x2d8] sm:$0xff]
        %v454 = vld [vmem:[%s227 + $0x2e0] sm:$0xff]
        %v455 = vld [vmem:[%s227 + $0x2e8] sm:$0xff]
        %v456 = vld [vmem:[%s227 + $0x2f0] sm:$0xff]
        %v457 = vld [vmem:[%s227 + $0x2f8] sm:$0xff]
        %v458 = vld [vmem:[%s227 + $0x300] sm:$0xff]
        %v459 = vld [vmem:[%s227 + $0x308] sm:$0xff]
        %v460 = vld [vmem:[%s227 + $0x310] sm:$0xff]
        %v461 = vld [vmem:[%s227 + $0x318] sm:$0xff]
        %v462 = vld [vmem:[%s227 + $0x320] sm:$0xff]
        %v463 = vld [vmem:[%s227 + $0x328] sm:$0xff]
        %v464 = vld [vmem:[%s227 + $0x330] sm:$0xff]
        %v465 = vld [vmem:[%s227 + $0x338] sm:$0xff]
        %v466 = vld [vmem:[%s227 + $0x340] sm:$0xff]
        %v467 = vld [vmem:[%s227 + $0x348] sm:$0xff]
        %v468 = vld [vmem:[%s227 + $0x350] sm:$0xff]
        %v469 = vld [vmem:[%s227 + $0x358] sm:$0xff]
        %v470 = vld [vmem:[%s227 + $0x360] sm:$0xff]
        %v471 = vld [vmem:[%s227 + $0x368] sm:$0xff]
        %v472 = vld [vmem:[%s227 + $0x370] sm:$0xff]
        %v473 = vld [vmem:[%s227 + $0x378] sm:$0xff]
        %v474 = vld [vmem:[%s227 + $0x380] sm:$0xff]
        %v475 = vld [vmem:[%s227 + $0x388] sm:$0xff]
        %v476 = vld [vmem:[%s227 + $0x390] sm:$0xff]
        %v477 = vld [vmem:[%s227 + $0x398] sm:$0xff]
        %v478 = vld [vmem:[%s227 + $0x3a0] sm:$0xff]
        %v479 = vld [vmem:[%s227 + $0x3a8] sm:$0xff]
        %v480 = vld [vmem:[%s227 + $0x3b0] sm:$0xff]
        %v481 = vld [vmem:[%s227 + $0x3b8] sm:$0xff]
        %v482 = vld [vmem:[%s227 + $0x3c0] sm:$0xff]
        %v483 = vld [vmem:[%s227 + $0x3c8] sm:$0xff]
        %v484 = vld [vmem:[%s227 + $0x3d0] sm:$0xff]
        %v485 = vld [vmem:[%s227 + $0x3d8] sm:$0xff]
        %v486 = vld [vmem:[%s227 + $0x3e0] sm:$0xff]
        %v487 = vld [vmem:[%s227 + $0x3e8] sm:$0xff]
        %v488 = vld [vmem:[%s227 + $0x3f0] sm:$0xff]
        %v489 = vld [vmem:[%s227 + $0x3f8] sm:$0xff]
        %v490 = vld [vmem:[%s227 + $0x400] sm:$0xff]
        %v491 = vld [vmem:[%s227 + $0x408] sm:$0xff]
        %v492 = vld [vmem:[%s227 + $0x410] sm:$0xff]
        %v493 = vld [vmem:[%s227 + $0x418] sm:$0xff]
        %v494 = vld [vmem:[%s227 + $0x420] sm:$0xff]
        %v495 = vld [vmem:[%s227 + $0x428] sm:$0xff]
        %v496 = vld [vmem:[%s227 + $0x430] sm:$0xff]
        %v497 = vld [vmem:[%s227 + $0x438] sm:$0xff]
        %v498 = vld [vmem:[%s227 + $0x440] sm:$0xff]
        %v499 = vld [vmem:[%s227 + $0x448] sm:$0xff]
        %v500 = vld [vmem:[%s227 + $0x450] sm:$0xff]
        %v501 = vld [vmem:[%s227 + $0x458] sm:$0xff]
        %v502 = vld [vmem:[%s227 + $0x460] sm:$0xff]
        %v503 = vld [vmem:[%s227 + $0x468] sm:$0xff]
        %v504 = vld [vmem:[%s227 + $0x470] sm:$0xff]
        %v505 = vld [vmem:[%s227 + $0x478] sm:$0xff]
        %v506 = vld [vmem:[%s227 + $0x480] sm:$0xff]
        %v507 = vld [vmem:[%s227 + $0x488] sm:$0xff]
        %v508 = vld [vmem:[%s227 + $0x490] sm:$0xff]
        %v509 = vld [vmem:[%s227 + $0x498] sm:$0xff]
        %v510 = vld [vmem:[%s227 + $0x4a0] sm:$0xff]
        %v511 = vld [vmem:[%s227 + $0x4a8] sm:$0xff]
        %513 = vset.pattern.permute.xlu0 0
        %514 = vperm.xlu0 %513, %v351
        %v515 = vpop.permute.xlu0 %514
        %518 = vset.pattern.permute.xlu0 0
        %519 = vperm.xlu0 %518, %v353
        %v520 = vpop.permute.xlu0 %519
        %523 = vset.pattern.permute.xlu0 0
        %524 = vperm.xlu0 %523, %v355
        %v525 = vpop.permute.xlu0 %524
        %528 = vset.pattern.permute.xlu0 0
        %529 = vperm.xlu0 %528, %v357
        %v530 = vpop.permute.xlu0 %529
        %533 = vset.pattern.permute.xlu0 0
        %534 = vperm.xlu0 %533, %v359
        %v535 = vpop.permute.xlu0 %534
        %538 = vset.pattern.permute.xlu0 0
        %539 = vperm.xlu0 %538, %v361
        %v540 = vpop.permute.xlu0 %539
        %v542 = vmul.f32 %v515, %v362
        %v543 = vmul.f32 %v515, %v363
        %v544 = vmul.f32 %v515, %v364
        %v545 = vmul.f32 %v515, %v365
        %v546 = vmul.f32 %v515, %v366
        %v547 = vmul.f32 %v515, %v367
        %v548 = vmul.f32 %v515, %v368
        %v549 = vmul.f32 %v515, %v369
        %v550 = vmul.f32 %v515, %v370
        %v551 = vmul.f32 %v515, %v371
        %v552 = vmul.f32 %v515, %v372
        %v553 = vmul.f32 %v515, %v373
        %v554 = vmul.f32 %v515, %v374
        %v555 = vmul.f32 %v515, %v375
        %v556 = vmul.f32 %v515, %v376
        %v557 = vmul.f32 %v515, %v377
        %v558 = vmul.f32 %v515, %v378
        %v559 = vmul.f32 %v515, %v379
        %v560 = vmul.f32 %v515, %v380
        %v561 = vmul.f32 %v515, %v381
        %v562 = vmul.f32 %v515, %v382
        %v563 = vmul.f32 %v515, %v383
        %v564 = vmul.f32 %v515, %v384
        %v565 = vmul.f32 %v515, %v385
        %v566 = vmul.f32 %v515, %v386
        %v567 = vmul.f32 %v520, %v387
        %v568 = vmul.f32 %v520, %v388
        %v569 = vmul.f32 %v520, %v389
        %v570 = vmul.f32 %v520, %v390
        %v571 = vmul.f32 %v520, %v391
        %v572 = vmul.f32 %v520, %v392
        %v573 = vmul.f32 %v520, %v393
        %v574 = vmul.f32 %v520, %v394
        %v575 = vmul.f32 %v520, %v395
        %v576 = vmul.f32 %v520, %v396
        %v577 = vmul.f32 %v520, %v397
        %v578 = vmul.f32 %v520, %v398
        %v579 = vmul.f32 %v520, %v399
        %v580 = vmul.f32 %v520, %v400
        %v581 = vmul.f32 %v520, %v401
        %v582 = vmul.f32 %v520, %v402
        %v583 = vmul.f32 %v520, %v403
        %v584 = vmul.f32 %v520, %v404
        %v585 = vmul.f32 %v520, %v405
        %v586 = vmul.f32 %v520, %v406
        %v587 = vmul.f32 %v520, %v407
        %v588 = vmul.f32 %v520, %v408
        %v589 = vmul.f32 %v520, %v409
        %v590 = vmul.f32 %v520, %v410
        %v591 = vmul.f32 %v520, %v411
        %v592 = vmul.f32 %v525, %v412
        %v593 = vmul.f32 %v525, %v413
        %v594 = vmul.f32 %v525, %v414
        %v595 = vmul.f32 %v525, %v415
        %v596 = vmul.f32 %v525, %v416
        %v597 = vmul.f32 %v525, %v417
        %v598 = vmul.f32 %v525, %v418
        %v599 = vmul.f32 %v525, %v419
        %v600 = vmul.f32 %v525, %v420
        %v601 = vmul.f32 %v525, %v421
        %v602 = vmul.f32 %v525, %v422
        %v603 = vmul.f32 %v525, %v423
        %v604 = vmul.f32 %v525, %v424
        %v605 = vmul.f32 %v525, %v425
        %v606 = vmul.f32 %v525, %v426
        %v607 = vmul.f32 %v525, %v427
        %v608 = vmul.f32 %v525, %v428
        %v609 = vmul.f32 %v525, %v429
        %v610 = vmul.f32 %v525, %v430
        %v611 = vmul.f32 %v525, %v431
        %v612 = vmul.f32 %v525, %v432
        %v613 = vmul.f32 %v525, %v433
        %v614 = vmul.f32 %v525, %v434
        %v615 = vmul.f32 %v525, %v435
        %v616 = vmul.f32 %v525, %v436
        %v617 = vmul.f32 %v530, %v437
        %v618 = vmul.f32 %v530, %v438
        %v619 = vmul.f32 %v530, %v439
        %v620 = vmul.f32 %v530, %v440
        %v621 = vmul.f32 %v530, %v441
        %v622 = vmul.f32 %v530, %v442
        %v623 = vmul.f32 %v530, %v443
        %v624 = vmul.f32 %v530, %v444
        %v625 = vmul.f32 %v530, %v445
        %v626 = vmul.f32 %v530, %v446
        %v627 = vmul.f32 %v530, %v447
        %v628 = vmul.f32 %v530, %v448
        %v629 = vmul.f32 %v530, %v449
        %v630 = vmul.f32 %v530, %v450
        %v631 = vmul.f32 %v530, %v451
        %v632 = vmul.f32 %v530, %v452
        %v633 = vmul.f32 %v530, %v453
        %v634 = vmul.f32 %v530, %v454
        %v635 = vmul.f32 %v530, %v455
        %v636 = vmul.f32 %v530, %v456
        %v637 = vmul.f32 %v530, %v457
        %v638 = vmul.f32 %v530, %v458
        %v639 = vmul.f32 %v530, %v459
        %v640 = vmul.f32 %v530, %v460
        %v641 = vmul.f32 %v530, %v461
        %v642 = vmul.f32 %v535, %v462
        %v643 = vmul.f32 %v535, %v463
        %v644 = vmul.f32 %v535, %v464
        %v645 = vmul.f32 %v535, %v465
        %v646 = vmul.f32 %v535, %v466
        %v647 = vmul.f32 %v535, %v467
        %v648 = vmul.f32 %v535, %v468
        %v649 = vmul.f32 %v535, %v469
        %v650 = vmul.f32 %v535, %v470
        %v651 = vmul.f32 %v535, %v471
        %v652 = vmul.f32 %v535, %v472
        %v653 = vmul.f32 %v535, %v473
        %v654 = vmul.f32 %v535, %v474
        %v655 = vmul.f32 %v535, %v475
        %v656 = vmul.f32 %v535, %v476
        %v657 = vmul.f32 %v535, %v477
        %v658 = vmul.f32 %v535, %v478
        %v659 = vmul.f32 %v535, %v479
        %v660 = vmul.f32 %v535, %v480
        %v661 = vmul.f32 %v535, %v481
        %v662 = vmul.f32 %v535, %v482
        %v663 = vmul.f32 %v535, %v483
        %v664 = vmul.f32 %v535, %v484
        %v665 = vmul.f32 %v535, %v485
        %v666 = vmul.f32 %v535, %v486
        %v667 = vmul.f32 %v540, %v487
        %v668 = vmul.f32 %v540, %v488
        %v669 = vmul.f32 %v540, %v489
        %v670 = vmul.f32 %v540, %v490
        %v671 = vmul.f32 %v540, %v491
        %v672 = vmul.f32 %v540, %v492
        %v673 = vmul.f32 %v540, %v493
        %v674 = vmul.f32 %v540, %v494
        %v675 = vmul.f32 %v540, %v495
        %v676 = vmul.f32 %v540, %v496
        %v677 = vmul.f32 %v540, %v497
        %v678 = vmul.f32 %v540, %v498
        %v679 = vmul.f32 %v540, %v499
        %v680 = vmul.f32 %v540, %v500
        %v681 = vmul.f32 %v540, %v501
        %v682 = vmul.f32 %v540, %v502
        %v683 = vmul.f32 %v540, %v503
        %v684 = vmul.f32 %v540, %v504
        %v685 = vmul.f32 %v540, %v505
        %v686 = vmul.f32 %v540, %v506
        %v687 = vmul.f32 %v540, %v507
        %v688 = vmul.f32 %v540, %v508
        %v689 = vmul.f32 %v540, %v509
        %v690 = vmul.f32 %v540, %v510
        %v691 = vmul.f32 %v540, %v511
        %692 = vst [vmem:[%s261] sm:$0xff] %v542
        %693 = vst [vmem:[%s261 + $0x8] sm:$0xff] %v543
        %694 = vst [vmem:[%s261 + $0x10] sm:$0xff] %v544
        %695 = vst [vmem:[%s261 + $0x18] sm:$0xff] %v545
        %696 = vst [vmem:[%s261 + $0x20] sm:$0xff] %v546
        %697 = vst [vmem:[%s261 + $0x28] sm:$0xff] %v547
        %698 = vst [vmem:[%s261 + $0x30] sm:$0xff] %v548
        %699 = vst [vmem:[%s261 + $0x38] sm:$0xff] %v549
        %700 = vst [vmem:[%s261 + $0x40] sm:$0xff] %v550
        %701 = vst [vmem:[%s261 + $0x48] sm:$0xff] %v551
        %702 = vst [vmem:[%s261 + $0x50] sm:$0xff] %v552
        %703 = vst [vmem:[%s261 + $0x58] sm:$0xff] %v553
        %704 = vst [vmem:[%s261 + $0x60] sm:$0xff] %v554
        %705 = vst [vmem:[%s261 + $0x68] sm:$0xff] %v555
        %706 = vst [vmem:[%s261 + $0x70] sm:$0xff] %v556
        %707 = vst [vmem:[%s261 + $0x78] sm:$0xff] %v557
        %708 = vst [vmem:[%s261 + $0x80] sm:$0xff] %v558
        %709 = vst [vmem:[%s261 + $0x88] sm:$0xff] %v559
        %710 = vst [vmem:[%s261 + $0x90] sm:$0xff] %v560
        %711 = vst [vmem:[%s261 + $0x98] sm:$0xff] %v561
        %712 = vst [vmem:[%s261 + $0xa0] sm:$0xff] %v562
        %713 = vst [vmem:[%s261 + $0xa8] sm:$0xff] %v563
        %714 = vst [vmem:[%s261 + $0xb0] sm:$0xff] %v564
        %715 = vst [vmem:[%s261 + $0xb8] sm:$0xff] %v565
        %vm716 = vcmask 523264
        %717 = vst.msk [vmem:[%s261 + $0xc0] sm:$0xff] %vm716, %v566
        %718 = vst [vmem:[%s261 + $0xc8] sm:$0xff] %v567
        %719 = vst [vmem:[%s261 + $0xd0] sm:$0xff] %v568
        %720 = vst [vmem:[%s261 + $0xd8] sm:$0xff] %v569
        %721 = vst [vmem:[%s261 + $0xe0] sm:$0xff] %v570
        %722 = vst [vmem:[%s261 + $0xe8] sm:$0xff] %v571
        %723 = vst [vmem:[%s261 + $0xf0] sm:$0xff] %v572
        %724 = vst [vmem:[%s261 + $0xf8] sm:$0xff] %v573
        %725 = vst [vmem:[%s261 + $0x100] sm:$0xff] %v574
        %726 = vst [vmem:[%s261 + $0x108] sm:$0xff] %v575
        %727 = vst [vmem:[%s261 + $0x110] sm:$0xff] %v576
        %728 = vst [vmem:[%s261 + $0x118] sm:$0xff] %v577
        %729 = vst [vmem:[%s261 + $0x120] sm:$0xff] %v578
        %730 = vst [vmem:[%s261 + $0x128] sm:$0xff] %v579
        %731 = vst [vmem:[%s261 + $0x130] sm:$0xff] %v580
        %732 = vst [vmem:[%s261 + $0x138] sm:$0xff] %v581
        %733 = vst [vmem:[%s261 + $0x140] sm:$0xff] %v582
        %734 = vst [vmem:[%s261 + $0x148] sm:$0xff] %v583
        %735 = vst [vmem:[%s261 + $0x150] sm:$0xff] %v584
        %736 = vst [vmem:[%s261 + $0x158] sm:$0xff] %v585
        %737 = vst [vmem:[%s261 + $0x160] sm:$0xff] %v586
        %738 = vst [vmem:[%s261 + $0x168] sm:$0xff] %v587
        %739 = vst [vmem:[%s261 + $0x170] sm:$0xff] %v588
        %740 = vst [vmem:[%s261 + $0x178] sm:$0xff] %v589
        %741 = vst [vmem:[%s261 + $0x180] sm:$0xff] %v590
        %742 = vst.msk [vmem:[%s261 + $0x188] sm:$0xff] %vm716, %v591
        %743 = vst [vmem:[%s261 + $0x190] sm:$0xff] %v592
        %744 = vst [vmem:[%s261 + $0x198] sm:$0xff] %v593
        %745 = vst [vmem:[%s261 + $0x1a0] sm:$0xff] %v594
        %746 = vst [vmem:[%s261 + $0x1a8] sm:$0xff] %v595
        %747 = vst [vmem:[%s261 + $0x1b0] sm:$0xff] %v596
        %748 = vst [vmem:[%s261 + $0x1b8] sm:$0xff] %v597
        %749 = vst [vmem:[%s261 + $0x1c0] sm:$0xff] %v598
        %750 = vst [vmem:[%s261 + $0x1c8] sm:$0xff] %v599
        %751 = vst [vmem:[%s261 + $0x1d0] sm:$0xff] %v600
        %752 = vst [vmem:[%s261 + $0x1d8] sm:$0xff] %v601
        %753 = vst [vmem:[%s261 + $0x1e0] sm:$0xff] %v602
        %754 = vst [vmem:[%s261 + $0x1e8] sm:$0xff] %v603
        %755 = vst [vmem:[%s261 + $0x1f0] sm:$0xff] %v604
        %756 = vst [vmem:[%s261 + $0x1f8] sm:$0xff] %v605
        %757 = vst [vmem:[%s261 + $0x200] sm:$0xff] %v606
        %758 = vst [vmem:[%s261 + $0x208] sm:$0xff] %v607
        %759 = vst [vmem:[%s261 + $0x210] sm:$0xff] %v608
        %760 = vst [vmem:[%s261 + $0x218] sm:$0xff] %v609
        %761 = vst [vmem:[%s261 + $0x220] sm:$0xff] %v610
        %762 = vst [vmem:[%s261 + $0x228] sm:$0xff] %v611
        %763 = vst [vmem:[%s261 + $0x230] sm:$0xff] %v612
        %764 = vst [vmem:[%s261 + $0x238] sm:$0xff] %v613
        %765 = vst [vmem:[%s261 + $0x240] sm:$0xff] %v614
        %766 = vst [vmem:[%s261 + $0x248] sm:$0xff] %v615
        %767 = vst.msk [vmem:[%s261 + $0x250] sm:$0xff] %vm716, %v616
        %768 = vst [vmem:[%s261 + $0x258] sm:$0xff] %v617
        %769 = vst [vmem:[%s261 + $0x260] sm:$0xff] %v618
        %770 = vst [vmem:[%s261 + $0x268] sm:$0xff] %v619
        %771 = vst [vmem:[%s261 + $0x270] sm:$0xff] %v620
        %772 = vst [vmem:[%s261 + $0x278] sm:$0xff] %v621
        %773 = vst [vmem:[%s261 + $0x280] sm:$0xff] %v622
        %774 = vst [vmem:[%s261 + $0x288] sm:$0xff] %v623
        %775 = vst [vmem:[%s261 + $0x290] sm:$0xff] %v624
        %776 = vst [vmem:[%s261 + $0x298] sm:$0xff] %v625
        %777 = vst [vmem:[%s261 + $0x2a0] sm:$0xff] %v626
        %778 = vst [vmem:[%s261 + $0x2a8] sm:$0xff] %v627
        %779 = vst [vmem:[%s261 + $0x2b0] sm:$0xff] %v628
        %780 = vst [vmem:[%s261 + $0x2b8] sm:$0xff] %v629
        %781 = vst [vmem:[%s261 + $0x2c0] sm:$0xff] %v630
        %782 = vst [vmem:[%s261 + $0x2c8] sm:$0xff] %v631
        %783 = vst [vmem:[%s261 + $0x2d0] sm:$0xff] %v632
        %784 = vst [vmem:[%s261 + $0x2d8] sm:$0xff] %v633
        %785 = vst [vmem:[%s261 + $0x2e0] sm:$0xff] %v634
        %786 = vst [vmem:[%s261 + $0x2e8] sm:$0xff] %v635
        %787 = vst [vmem:[%s261 + $0x2f0] sm:$0xff] %v636
        %788 = vst [vmem:[%s261 + $0x2f8] sm:$0xff] %v637
        %789 = vst [vmem:[%s261 + $0x300] sm:$0xff] %v638
        %790 = vst [vmem:[%s261 + $0x308] sm:$0xff] %v639
        %791 = vst [vmem:[%s261 + $0x310] sm:$0xff] %v640
        %792 = vst.msk [vmem:[%s261 + $0x318] sm:$0xff] %vm716, %v641
        %793 = vst [vmem:[%s261 + $0x320] sm:$0xff] %v642
        %794 = vst [vmem:[%s261 + $0x328] sm:$0xff] %v643
        %795 = vst [vmem:[%s261 + $0x330] sm:$0xff] %v644
        %796 = vst [vmem:[%s261 + $0x338] sm:$0xff] %v645
        %797 = vst [vmem:[%s261 + $0x340] sm:$0xff] %v646
        %798 = vst [vmem:[%s261 + $0x348] sm:$0xff] %v647
        %799 = vst [vmem:[%s261 + $0x350] sm:$0xff] %v648
        %800 = vst [vmem:[%s261 + $0x358] sm:$0xff] %v649
        %801 = vst [vmem:[%s261 + $0x360] sm:$0xff] %v650
        %802 = vst [vmem:[%s261 + $0x368] sm:$0xff] %v651
        %803 = vst [vmem:[%s261 + $0x370] sm:$0xff] %v652
        %804 = vst [vmem:[%s261 + $0x378] sm:$0xff] %v653
        %805 = vst [vmem:[%s261 + $0x380] sm:$0xff] %v654
        %806 = vst [vmem:[%s261 + $0x388] sm:$0xff] %v655
        %807 = vst [vmem:[%s261 + $0x390] sm:$0xff] %v656
        %808 = vst [vmem:[%s261 + $0x398] sm:$0xff] %v657
        %809 = vst [vmem:[%s261 + $0x3a0] sm:$0xff] %v658
        %810 = vst [vmem:[%s261 + $0x3a8] sm:$0xff] %v659
        %811 = vst [vmem:[%s261 + $0x3b0] sm:$0xff] %v660
        %812 = vst [vmem:[%s261 + $0x3b8] sm:$0xff] %v661
        %813 = vst [vmem:[%s261 + $0x3c0] sm:$0xff] %v662
        %814 = vst [vmem:[%s261 + $0x3c8] sm:$0xff] %v663
        %815 = vst [vmem:[%s261 + $0x3d0] sm:$0xff] %v664
        %816 = vst [vmem:[%s261 + $0x3d8] sm:$0xff] %v665
        %817 = vst.msk [vmem:[%s261 + $0x3e0] sm:$0xff] %vm716, %v666
        %818 = vst [vmem:[%s261 + $0x3e8] sm:$0xff] %v667
        %819 = vst [vmem:[%s261 + $0x3f0] sm:$0xff] %v668
        %820 = vst [vmem:[%s261 + $0x3f8] sm:$0xff] %v669
        %821 = vst [vmem:[%s261 + $0x400] sm:$0xff] %v670
        %822 = vst [vmem:[%s261 + $0x408] sm:$0xff] %v671
        %823 = vst [vmem:[%s261 + $0x410] sm:$0xff] %v672
        %824 = vst [vmem:[%s261 + $0x418] sm:$0xff] %v673
        %825 = vst [vmem:[%s261 + $0x420] sm:$0xff] %v674
        %826 = vst [vmem:[%s261 + $0x428] sm:$0xff] %v675
        %827 = vst [vmem:[%s261 + $0x430] sm:$0xff] %v676
        %828 = vst [vmem:[%s261 + $0x438] sm:$0xff] %v677
        %829 = vst [vmem:[%s261 + $0x440] sm:$0xff] %v678
        %830 = vst [vmem:[%s261 + $0x448] sm:$0xff] %v679
        %831 = vst [vmem:[%s261 + $0x450] sm:$0xff] %v680
        %832 = vst [vmem:[%s261 + $0x458] sm:$0xff] %v681
        %833 = vst [vmem:[%s261 + $0x460] sm:$0xff] %v682
        %834 = vst [vmem:[%s261 + $0x468] sm:$0xff] %v683
        %835 = vst [vmem:[%s261 + $0x470] sm:$0xff] %v684
        %836 = vst [vmem:[%s261 + $0x478] sm:$0xff] %v685
        %837 = vst [vmem:[%s261 + $0x480] sm:$0xff] %v686
        %838 = vst [vmem:[%s261 + $0x488] sm:$0xff] %v687
        %839 = vst [vmem:[%s261 + $0x490] sm:$0xff] %v688
        %840 = vst [vmem:[%s261 + $0x498] sm:$0xff] %v689
        %841 = vst [vmem:[%s261 + $0x4a0] sm:$0xff] %v690
        %842 = vst.msk [vmem:[%s261 + $0x4a8] sm:$0xff] %vm716, %v691
        %s843 = sand.u32 %s129, 1
        %s844 = scalar_lea.sflag [#allocation4], %s843
        %s845 = sand.u32 %s129, 1
        %s846 = smul.addr %s845, 1200
        %s847 = scalar_lea.vmem [#allocation7], %s846
        // Predicated region
        $region45: #{tpu_custom_call.1} parent=35 // pred_check
          %p848 = pneg %p139
        $region46: #{tpu_custom_call.1} parent=35 // pred_check_branch
          %850 = sbr.rel (%p848) target = $region48
        $region47: #{tpu_custom_call.1} parent=35 // pred_region
          %s851 = smul.u32 6, %s22
          %s853 = ssub.s32 19200, 19200
          %854 = vsyncadd %s844, %s853
          %s855 = smul.addr %s851, 25
          %s856 = smul.addr %s855, 128
          %s857 = scalar_lea.hbm %s4, %s856
          %s858 = sshll.u32 %s847, 4
          %s859 = int_to_ptr.vmem [resolvable:$true] %s858
          %864 = dma.vmem_to_hbm [thread:$0]  %s859, 19200, %s857, %s844, 3200, 3200, 200
        $region48: #{tpu_custom_call.1} parent=35 // pred_fallthru
          _
      $region36: #{tpu_custom_call.1} parent=5 // pred_fallthru
        _
      %p865 = scmp.le.s32.totalorder 2, %s17
      // Predicated region
      $region49: #{tpu_custom_call.1} parent=5 // pred_check
        %p866 = pneg %p865
      $region50: #{tpu_custom_call.1} parent=5 // pred_check_branch
        %868 = sbr.rel (%p866) target = $region52
      $region51: #{tpu_custom_call.1} parent=5 // pred_region
        %s869 = ssub.s32 %s17, 2
        // Predicated region
        $region53: #{tpu_custom_call.1} parent=51 // pred_check
          %p870 = pneg %p145
        $region54: #{tpu_custom_call.1} parent=51 // pred_check_branch
          %872 = sbr.rel (%p870) target = $region56
        $region55: #{tpu_custom_call.1} parent=51 // pred_region
          %s873 = sand.u32 %s130, 1
          %s874 = scalar_lea.sflag [#allocation4], %s873
          %s875 = sand.u32 %s130, 1
          %s876 = smul.addr %s875, 1200
          %s877 = scalar_lea.vmem [#allocation7], %s876
          %878 = dma.done %s874, 19200
        $region56: #{tpu_custom_call.1} parent=51 // pred_fallthru
          _
      $region52: #{tpu_custom_call.1} parent=5 // pred_fallthru
        _
    $region6: #{tpu_custom_call.1} parent=1 // loop_footer
      %s21 = sadd.s32 1, %s17
    $region7: #{tpu_custom_call.1} parent=1 // loop_footer_branch
      %16 = sbr.rel target = $region3
    $region8: #{tpu_custom_call.1} parent=1 // loop_exit
      _
    %879 = vsyncpa [#allocation3], 1
    %s880 = scalar_lea.sflag [#allocation3], 1
    %881 = vsyncpa %s880, 1
    %882 = vsyncpa [#allocation6], 1
    %s883 = scalar_lea.sflag [#allocation6], 1
    %884 = vsyncpa %s883, 1
    %885 = vsyncpa [#allocation4], 1
    %s886 = scalar_lea.sflag [#allocation4], 1
    %887 = vsyncpa %s886, 1

</llo_original>
